<compile_context>
chip_gen: v7x
topology: tpu7x:2x2x1
jax: 0.10.0
libtpu: 0.0.40
codegen_flags: <defaults>
</compile_context>

<pallas_src>
import jax
import jax.numpy as jnp
from jax.experimental import pallas as pl
from jax.experimental.pallas import tpu as pltpu


def _round_up(x, m):
    return ((x + m - 1) // m) * m


def _make_cross_kernel(num_layers, use_mxu):
    """Build the kernel body for a fixed layer count / dot-product strategy."""

    def kernel(x_ref, w_ref, beta_ref, cfin_ref, o_ref):
        # x_ref:    (tb, D) caller dtype VMEM  -- streamed batch tile of x0
        # w_ref:    (L, D) or (D, L) f32 VMEM  -- resident cross weights
        # beta_ref: (L,) f32 SMEM              -- beta[l] = (sum_{j<l} b_j) . w_l
        # cfin_ref: (1, D) f32 VMEM            -- sum of all biases (resident)
        # o_ref:    (tb, D) caller dtype VMEM
        x0 = x_ref[...].astype(jnp.float32)                      # up-cast per tile
        a = jnp.ones((x0.shape[0], 1), dtype=jnp.float32)

        if use_mxu:
            # w_ref is (D, L): one MXU matmul yields every layer dot product.
            s_all = jnp.dot(x0, w_ref[...],
                            preferred_element_type=jnp.float32)  # (tb, L)
            for l in range(num_layers):                          # static unroll
                a = a * (s_all[:, l:l + 1] + 1.0) + beta_ref[l]
        else:
            # w_ref is (L, D): L independent VPU-mul + XLU lane reductions.
            w = w_ref[...]
            for l in range(num_layers):                          # static unroll
                s_l = jnp.sum(x0 * w[l][None, :], axis=-1, keepdims=True)
                a = a * (s_l + 1.0) + beta_ref[l]

        # x_L = x0 * a_L + sum_j b_j  -- single fused full-width pass.
        o_ref[...] = (x0 * a + cfin_ref[...]).astype(o_ref.dtype)

    return kernel


def cross_network(x, w_stack, b_stack, *, block_b=None, mxu_layer_threshold=8):
    """x: (B, D); w_stack: (L, D) (rows = w[i].squeeze(-1)); b_stack: (L, D)."""
    B, D = x.shape
    L = w_stack.shape[0]
    out_dtype = x.dtype
    itemsize = x.dtype.itemsize
    sub = 8 * max(1, 4 // itemsize)          # sublane multiple: 8 (f32), 16 (bf16)

    # ---- parameter preprocessing (data independent, O(L*D), stays f32) -----
    w32 = w_stack.astype(jnp.float32)
    b32 = b_stack.astype(jnp.float32)
    csum = jnp.cumsum(b32, axis=0)                                   # (L, D)
    c_prefix = jnp.concatenate(
        [jnp.zeros((1, D), jnp.float32), csum[:-1]], axis=0)         # c_l = sum_{j<l} b_j
    beta = jnp.sum(c_prefix * w32, axis=-1)                          # (L,)
    c_final = csum[-1][None, :]                                      # (1, D)

    use_mxu = L >= mxu_layer_threshold
    w_res = w32.T if use_mxu else w32        # (D, L) for the MXU path, else (L, D)

    # ---- generation-aware batch-tile sizing --------------------------------
    try:
        vmem_cap = int(getattr(pltpu.get_tpu_info(), "vmem_capacity_bytes",
                               64 << 20))
    except Exception:
        vmem_cap = 64 << 20
    if vmem_cap >= (100 << 20):              # v5e / v6e: 128 MiB physical VMEM
        per_buf_f32 = 8 << 20
        vmem_clamp = 96 << 20
    else:                                    # v7x: 64 MiB physical VMEM
        per_buf_f32 = 6 << 20
        vmem_clamp = 44 << 20

    if B <= sub:
        tb = B                               # single full block (exempt from 8/16 rule)
    else:
        max_tb = (B // sub) * sub            # keep first blocks fully in-bounds
        if block_b is not None:
            tb = _round_up(block_b, sub)
        else:
            tb = max(sub, (per_buf_f32 // (D * 4)) // sub * sub)
            # >= 2 grid steps whenever possible -> v7x megacore sharding.
            tb = min(tb, _round_up(pl.cdiv(B, 2), sub))
        tb = max(sub, min(tb, max_tb))
    grid = (pl.cdiv(B, tb),)

    vmem_bytes = (4 * tb * D * itemsize          # x + out, double-buffered
                  + 3 * tb * D * 4               # f32 in-kernel temporaries headroom
                  + 4 * (w_res.size + D + L) * 4  # resident params
                  + (2 << 20))
    vmem_bytes = int(min(max(vmem_bytes, 8 << 20), vmem_clamp))

    kernel = _make_cross_kernel(L, use_mxu)

    out = pl.pallas_call(
        kernel,
        out_shape=jax.ShapeDtypeStruct((B, D), out_dtype),
        grid_spec=pltpu.PrefetchScalarGridSpec(
            num_scalar_prefetch=0,
            grid=grid,
            in_specs=[
                pl.BlockSpec((tb, D), lambda i: (i, 0)),             # x: streamed
                pl.BlockSpec(w_res.shape, lambda i: (0, 0)),         # w: resident
                pl.BlockSpec(memory_space=pltpu.MemorySpace.SMEM),   # beta scalars
                pl.BlockSpec((1, D), lambda i: (0, 0)),              # sum of biases
            ],
            out_specs=pl.BlockSpec((tb, D), lambda i: (i, 0)),
        ),
        compiler_params=pltpu.CompilerParams(
            dimension_semantics=("parallel",),
            vmem_limit_bytes=vmem_bytes,
        ),
    )(x, w_res, beta, c_final)

    return out


def reference_cross_network(x, w_stack, b_stack):
    """Pure-JAX reference mirroring the PyTorch forward exactly."""
    x0 = x
    out = x
    for i in range(w_stack.shape[0]):
        x_l_w = jnp.matmul(out, w_stack[i][:, None],
                           precision=jax.lax.Precision.HIGHEST)      # (B, 1)
        out = x0 * x_l_w + b_stack[i][None, :] + out
    return out


if __name__ == "__main__":
    key = jax.random.PRNGKey(0)
    k1, k2, k3, k4, k5 = jax.random.split(key, 5)

    def make_params(kk, L, D):
        kw, kb = jax.random.split(kk)
        bound = float(jnp.sqrt(6.0 / (D + 1)))   # xavier_uniform (fan_in=D, fan_out=1)
        w = jax.random.uniform(kw, (L, D), jnp.float32, -bound, bound)
        b = 0.1 * jax.random.normal(kb, (L, D), dtype=jnp.float32)
        return w, b

    # Case 1: canonical small shapes, PyTorch default init (zero biases), VPU path.
    B, D, L = 8, 32, 3
    x = jax.random.normal(k1, (B, D), dtype=jnp.float32)
    w1, _ = make_params(k2, L, D)
    b_zero = jnp.zeros((L, D), jnp.float32)
    out0 = jax.block_until_ready(cross_network(x, w1, b_zero))
    ref0 = reference_cross_network(x, w1, b_zero)
    assert out0.shape == (B, D) and out0.dtype == x.dtype
    assert jnp.allclose(out0, ref0, atol=1e-5, rtol=1e-5), "mismatch (zero bias)"

    # Case 2: non-zero biases + partial last batch tile (B % tb != 0).
    B2 = 24
    x2 = jax.random.normal(k3, (B2, D), dtype=jnp.float32)
    w2, b2 = make_params(k2, L, D)
    out1 = jax.block_until_ready(cross_network(x2, w2, b2, block_b=16))
    ref1 = reference_cross_network(x2, w2, b2)
    assert jnp.allclose(out1, ref1, atol=1e-5, rtol=1e-5), "mismatch (partial tile)"

    # Case 3: deeper stack (L >= 8) -> MXU dot path, D not a multiple of 128.
    B3, D3, L3 = 16, 96, 9
    x3 = jax.random.normal(k4, (B3, D3), dtype=jnp.float32)
    w3, b3 = make_params(k5, L3, D3)
    out2 = jax.block_until_ready(cross_network(x3, w3, b3))
    ref2 = reference_cross_network(x3, w3, b3)
    assert jnp.allclose(out2, ref2, atol=1e-4, rtol=1e-4), "mismatch (MXU path)"

    # Case 4: bf16 activation streaming (params stay f32; compute in f32).
    x4 = x3.astype(jnp.bfloat16)
    out3 = jax.block_until_ready(cross_network(x4, w3, b3))
    ref3 = reference_cross_network(x4.astype(jnp.float32), w3, b3)
    assert out3.dtype == jnp.bfloat16
    assert jnp.allclose(out3.astype(jnp.float32), ref3, atol=5e-2, rtol=5e-2), \
        "mismatch (bf16 stream)"

    print("KERNEL_OK")
</pallas_src>

<mosaic_0001>
module attributes {stable_mosaic.version = 11 : i64} {
  func.func @kernel(%arg0: i32, %arg1: memref<8x32xf32, #tpu.memory_space<vmem>>, %arg2: memref<3x32xf32, #tpu.memory_space<vmem>>, %arg3: memref<3xf32, #tpu.memory_space<smem>>, %arg4: memref<1x32xf32, #tpu.memory_space<vmem>>, %arg5: memref<8x32xf32, #tpu.memory_space<vmem>>) attributes {dimension_semantics = [#tpu.dimension_semantics<parallel>], iteration_bounds = array<i64: 1>, scalar_prefetch = 0 : i64, scratch_operands = 0 : i64, tpu.core_type = #tpu.core_type<tc>, window_params = [{transform_indices = @transform_0, window_bounds = array<i64: 8, 32>}, {pipeline_mode = #tpu.pipeline_mode<synchronous>, transform_indices = @transform_1, window_bounds = array<i64: 3, 32>}, {transform_indices = @transform_2, window_bounds = array<i64: 3>}, {pipeline_mode = #tpu.pipeline_mode<synchronous>, transform_indices = @transform_3, window_bounds = array<i64: 1, 32>}, {transform_indices = @transform_4, window_bounds = array<i64: 8, 32>}]} {
    %c0 = arith.constant 0 : index
    %c0_0 = arith.constant 0 : index
    %0 = vector.load %arg1[%c0, %c0_0] : memref<8x32xf32, #tpu.memory_space<vmem>>, vector<8x32xf32>
    %cst = arith.constant 1.000000e+00 : f32
    %1 = vector.broadcast %cst : f32 to vector<8x1xf32>
    %c0_1 = arith.constant 0 : index
    %c0_2 = arith.constant 0 : index
    %2 = vector.load %arg2[%c0_1, %c0_2] : memref<3x32xf32, #tpu.memory_space<vmem>>, vector<3x32xf32>
    %3 = vector.extract_strided_slice %2 {offsets = [0, 0], sizes = [1, 32], strides = [1, 1]} : vector<3x32xf32> to vector<1x32xf32>
    %4 = vector.shape_cast %3 : vector<1x32xf32> to vector<32xf32>
    %5 = vector.shape_cast %4 : vector<32xf32> to vector<1x32xf32>
    %6 = vector.broadcast %5 : vector<1x32xf32> to vector<8x32xf32>
    %7 = arith.mulf %0, %6 : vector<8x32xf32>
    %cst_3 = arith.constant dense<0.000000e+00> : vector<8xf32>
    %8 = vector.multi_reduction <add>, %7, %cst_3 [1] : vector<8x32xf32> to vector<8xf32>
    %9 = vector.shape_cast %8 : vector<8xf32> to vector<8x1xf32>
    %cst_4 = arith.constant 1.000000e+00 : f32
    %10 = vector.broadcast %cst_4 : f32 to vector<8x1xf32>
    %11 = arith.addf %9, %10 : vector<8x1xf32>
    %12 = arith.mulf %1, %11 : vector<8x1xf32>
    %c0_5 = arith.constant 0 : index
    %13 = memref.load %arg3[%c0_5] : memref<3xf32, #tpu.memory_space<smem>>
    %14 = vector.broadcast %13 : f32 to vector<8x1xf32>
    %15 = arith.addf %12, %14 : vector<8x1xf32>
    %16 = vector.extract_strided_slice %2 {offsets = [1, 0], sizes = [1, 32], strides = [1, 1]} : vector<3x32xf32> to vector<1x32xf32>
    %17 = vector.shape_cast %16 : vector<1x32xf32> to vector<32xf32>
    %18 = vector.shape_cast %17 : vector<32xf32> to vector<1x32xf32>
    %19 = vector.broadcast %18 : vector<1x32xf32> to vector<8x32xf32>
    %20 = arith.mulf %0, %19 : vector<8x32xf32>
    %cst_6 = arith.constant dense<0.000000e+00> : vector<8xf32>
    %21 = vector.multi_reduction <add>, %20, %cst_6 [1] : vector<8x32xf32> to vector<8xf32>
    %22 = vector.shape_cast %21 : vector<8xf32> to vector<8x1xf32>
    %cst_7 = arith.constant 1.000000e+00 : f32
    %23 = vector.broadcast %cst_7 : f32 to vector<8x1xf32>
    %24 = arith.addf %22, %23 : vector<8x1xf32>
    %25 = arith.mulf %15, %24 : vector<8x1xf32>
    %c1 = arith.constant 1 : index
    %26 = memref.load %arg3[%c1] : memref<3xf32, #tpu.memory_space<smem>>
    %27 = vector.broadcast %26 : f32 to vector<8x1xf32>
    %28 = arith.addf %25, %27 : vector<8x1xf32>
    %29 = vector.extract_strided_slice %2 {offsets = [2, 0], sizes = [1, 32], strides = [1, 1]} : vector<3x32xf32> to vector<1x32xf32>
    %30 = vector.shape_cast %29 : vector<1x32xf32> to vector<32xf32>
    %31 = vector.shape_cast %30 : vector<32xf32> to vector<1x32xf32>
    %32 = vector.broadcast %31 : vector<1x32xf32> to vector<8x32xf32>
    %33 = arith.mulf %0, %32 : vector<8x32xf32>
    %cst_8 = arith.constant dense<0.000000e+00> : vector<8xf32>
    %34 = vector.multi_reduction <add>, %33, %cst_8 [1] : vector<8x32xf32> to vector<8xf32>
    %35 = vector.shape_cast %34 : vector<8xf32> to vector<8x1xf32>
    %cst_9 = arith.constant 1.000000e+00 : f32
    %36 = vector.broadcast %cst_9 : f32 to vector<8x1xf32>
    %37 = arith.addf %35, %36 : vector<8x1xf32>
    %38 = arith.mulf %28, %37 : vector<8x1xf32>
    %c2 = arith.constant 2 : index
    %39 = memref.load %arg3[%c2] : memref<3xf32, #tpu.memory_space<smem>>
    %40 = vector.broadcast %39 : f32 to vector<8x1xf32>
    %41 = arith.addf %38, %40 : vector<8x1xf32>
    %42 = vector.broadcast %41 : vector<8x1xf32> to vector<8x32xf32>
    %43 = arith.mulf %0, %42 : vector<8x32xf32>
    %c0_10 = arith.constant 0 : index
    %c0_11 = arith.constant 0 : index
    %44 = vector.load %arg4[%c0_10, %c0_11] : memref<1x32xf32, #tpu.memory_space<vmem>>, vector<1x32xf32>
    %45 = vector.broadcast %44 : vector<1x32xf32> to vector<8x32xf32>
    %46 = arith.addf %43, %45 : vector<8x32xf32>
    %c0_12 = arith.constant 0 : index
    %c0_13 = arith.constant 0 : index
    %47 = vector.load %arg5[%c0_12, %c0_13] : memref<8x32xf32, #tpu.memory_space<vmem>>, vector<8x32xf32>
    tpu.vector_store %arg5[%c0_12, %c0_13], %46 {strides = array<i32>} : memref<8x32xf32, #tpu.memory_space<vmem>>, vector<8x32xf32>,
    return
  }
  func.func @transform_0(%arg0: i32) -> (i32, i32) {
    %c0_i32 = arith.constant 0 : i32
    %c0_i32_0 = arith.constant 0 : i32
    return %arg0, %c0_i32 : i32, i32
  }
  func.func @transform_1(%arg0: i32) -> (i32, i32) {
    %c0_i32 = arith.constant 0 : i32
    %c0_i32_0 = arith.constant 0 : i32
    %c0_i32_1 = arith.constant 0 : i32
    return %c0_i32, %c0_i32_0 : i32, i32
  }
  func.func @transform_2(%arg0: i32) -> i32 {
    %c0_i32 = arith.constant 0 : i32
    %c0_i32_0 = arith.constant 0 : i32
    return %c0_i32 : i32
  }
  func.func @transform_3(%arg0: i32) -> (i32, i32) {
    %c0_i32 = arith.constant 0 : i32
    %c0_i32_0 = arith.constant 0 : i32
    %c0_i32_1 = arith.constant 0 : i32
    return %c0_i32, %c0_i32_0 : i32, i32
  }
  func.func @transform_4(%arg0: i32) -> (i32, i32) {
    %c0_i32 = arith.constant 0 : i32
    %c0_i32_0 = arith.constant 0 : i32
    return %arg0, %c0_i32 : i32, i32
  }
}

</mosaic_0001>

<llo_original>
// kernel: tpu_custom_call.1
$region0: #{tpu_custom_call.1}
  #allocation0 [shape = 'u32[]', space=smem, size = 0x4, offset = 0x4, fixed_abs, tag = 'smem constant byte address 0x4 - core index']
  #allocation1 [shape = 'u32[144,128]{1,0:T(1,128)}', space=vmem, size = 0x12000, scoped, tag = 'internal scratch']
  %s0 = inlined_call_operand.hbm [shape: f32[8,32], index: 0, kind: input, shape index: {}]
  %s1 = inlined_call_operand.hbm [shape: f32[3,32], index: 1, kind: input, shape index: {}]
  %s2 = inlined_call_operand.vmem [shape: f32[3], index: 2, kind: input, shape index: {}]
  %s3 = inlined_call_operand.vmem [shape: f32[1,32], index: 3, kind: input, shape index: {}]
  %s4 = inlined_call_operand.hbm [shape: f32[8,32], index: 4, kind: output, shape index: {}]
  %s5 = sld [smem:[#allocation0]]
  $region38: #{tpu_custom_call.1} parent=0
    _
  %s7 = ssub.s32 1, %s5
  %s8 = scalar_select 0, %s7, %s5
  $region1: #{tpu_custom_call.1} parent=0
    #allocation2 [shape = 'u8[4096]{0}', space=vmem, size = 0x1000, scoped, tag = 'input window, operand 0, single buffered']
    #allocation3 [shape = 's32[1]{0}', space=sflag, size = 0x4, scoped, tag = 'scoped memory for tpu_custom_call.1']
    #allocation4 [shape = 's32[1]{0}', space=sflag, size = 0x4, scoped, tag = 'scoped memory for tpu_custom_call.1']
    #allocation5 [shape = 's32[1]{0}', space=sflag, size = 0x4, scoped, tag = 'scoped memory for tpu_custom_call.1']
    #allocation6 [shape = 'u8[2048]{0}', space=vmem, size = 0x800, scoped, tag = 'input window, operand 1, single buffered']
    #allocation7 [shape = 's32[1]{0}', space=sflag, size = 0x4, scoped, tag = 'scoped memory for tpu_custom_call.1']
    #allocation8 [shape = 'u8[512]{0}', space=smem, size = 0x200, scoped, tag = 'input window, operand 2, single buffered']
    #allocation9 [shape = 'u8[4096]{0}', space=vmem, size = 0x1000, scoped, tag = 'output window, operand 0, single buffered']
    %9 = vsyncpa [#allocation3], 0
    %10 = vsyncpa [#allocation7], 0
    %11 = vsyncpa [#allocation5], 0
    %12 = vsyncpa [#allocation4], 0
    // Predicated region
    $region2: #{tpu_custom_call.1} parent=1 // pred_check
      _
    $region3: #{tpu_custom_call.1} parent=1 // pred_check_branch
      %14 = sbr.rel (0) target = $region5
    $region4: #{tpu_custom_call.1} parent=1 // pred_region
      %s16 = ssub.s32 128, 128
      %17 = vsyncadd [#allocation3], %s16
      %s19 = sshll.u32 [#allocation2], 4
      %s20 = int_to_ptr.vmem [resolvable:$true] %s19
      %22 = dma.hbm_to_vmem [thread:$0]  %s0, 128, %s20, [#allocation3]
    $region5: #{tpu_custom_call.1} parent=1 // pred_fallthru
      _
    // Predicated region
    $region6: #{tpu_custom_call.1} parent=1 // pred_check
      _
    $region7: #{tpu_custom_call.1} parent=1 // pred_check_branch
      %24 = sbr.rel (0) target = $region9
    $region8: #{tpu_custom_call.1} parent=1 // pred_region
      %s26 = ssub.s32 64, 64
      %27 = vsyncadd [#allocation7], %s26
      %s29 = sshll.u32 [#allocation6], 4
      %s30 = int_to_ptr.vmem [resolvable:$true] %s29
      %32 = dma.hbm_to_vmem [thread:$0]  %s1, 64, %s30, [#allocation7]
    $region9: #{tpu_custom_call.1} parent=1 // pred_fallthru
      _
    // Predicated region
    $region10: #{tpu_custom_call.1} parent=1 // pred_check
      _
    $region11: #{tpu_custom_call.1} parent=1 // pred_check_branch
      %34 = sbr.rel (0) target = $region13
    $region12: #{tpu_custom_call.1} parent=1 // pred_region
      %s36 = ssub.s32 16, 16
      %37 = vsyncadd [#allocation5], %s36
      %s39 = sshll.u32 %s2, 4
      %s40 = int_to_ptr.vmem [resolvable:$true] %s39
      %42 = dma.vmem_to_smem %s40, 16, [#allocation8], [#allocation5]
    $region13: #{tpu_custom_call.1} parent=1 // pred_fallthru
      _
    // Predicated region
    $region14: #{tpu_custom_call.1} parent=1 // pred_check
      _
    $region15: #{tpu_custom_call.1} parent=1 // pred_check_branch
      %44 = sbr.rel (0) target = $region17
    $region16: #{tpu_custom_call.1} parent=1 // pred_region
      _
    $region17: #{tpu_custom_call.1} parent=1 // pred_fallthru
      _
    // Predicated region
    $region18: #{tpu_custom_call.1} parent=1 // pred_check
      _
    $region19: #{tpu_custom_call.1} parent=1 // pred_check_branch
      %46 = sbr.rel (0) target = $region21
    $region20: #{tpu_custom_call.1} parent=1 // pred_region
      %47 = dma.done [#allocation3], 128
    $region21: #{tpu_custom_call.1} parent=1 // pred_fallthru
      _
    // Predicated region
    $region22: #{tpu_custom_call.1} parent=1 // pred_check
      _
    $region23: #{tpu_custom_call.1} parent=1 // pred_check_branch
      %49 = sbr.rel (0) target = $region25
    $region24: #{tpu_custom_call.1} parent=1 // pred_region
      %50 = dma.done [#allocation7], 64
    $region25: #{tpu_custom_call.1} parent=1 // pred_fallthru
      _
    // Predicated region
    $region26: #{tpu_custom_call.1} parent=1 // pred_check
      _
    $region27: #{tpu_custom_call.1} parent=1 // pred_check_branch
      %52 = sbr.rel (0) target = $region29
    $region28: #{tpu_custom_call.1} parent=1 // pred_region
      %53 = dma.done [#allocation5], 16
    $region29: #{tpu_custom_call.1} parent=1 // pred_fallthru
      _
    %54 = sfence
    %v55 = vld [vmem:[#allocation2] sm:$0xff]
    %v56 = vld [vmem:[#allocation6] sm:$0x7]
    %v57 = vlaneseq
    %v58 = vshrl.u32 %v57, 7
    %v59 = vsub.s32 0, %v58
    %v60 = vrot.slane %v56, %v59
    %v61 = vmul.f32 %v55, %v60
    %vm62 = vcmask 261120
    %v63 = vsel %vm62, %v61, 0.0
    %64 = vadd.xlane.f32.xlu0 %v63
    %v65 = vpop.xlane.xlu0 %64
    %v66 = vadd.f32 %v65, 1.0
    %s67 = sld [smem:[#allocation8]]
    %v68 = vstv %s67
    %v69 = vadd.f32 %v66, %v68
    %v70 = vlaneseq
    %v71 = vshrl.u32 %v70, 7
    %v72 = vsub.s32 1, %v71
    %v73 = vrot.slane %v56, %v72
    %v74 = vmul.f32 %v55, %v73
    %v75 = vsel %vm62, %v74, 0.0
    %76 = vadd.xlane.f32.xlu0 %v75
    %v77 = vpop.xlane.xlu0 %76
    %v78 = vadd.f32 %v77, 1.0
    %v79 = vmul.f32 %v69, %v78
    %s80 = sld [smem:[#allocation8 + $0x1]]
    %v81 = vstv %s80
    %v82 = vadd.f32 %v79, %v81
    %v83 = vlaneseq
    %v84 = vshrl.u32 %v83, 7
    %v85 = vsub.s32 2, %v84
    %v86 = vrot.slane %v56, %v85
    %v87 = vmul.f32 %v55, %v86
    %v88 = vsel %vm62, %v87, 0.0
    %89 = vadd.xlane.f32.xlu0 %v88
    %v90 = vpop.xlane.xlu0 %89
    %v91 = vadd.f32 %v90, 1.0
    %v92 = vmul.f32 %v82, %v91
    %s93 = sld [smem:[#allocation8 + $0x2]]
    %v94 = vstv %s93
    %v95 = vadd.f32 %v92, %v94
    %v96 = vmul.f32 %v55, %v95
    %v97 = vld [vmem:[%s3] sm:$0x1]
    %v99 = vlaneseq
    %v100 = vshrl.u32 %v99, 7
    %v101 = vsub.s32 0, %v100
    %v102 = vrot.slane %v97, %v101
    %v104 = vadd.f32 %v96, %v102
    %105 = vst.msk [vmem:[#allocation9] sm:$0xff] %vm62, %v104
    // Predicated region
    $region30: #{tpu_custom_call.1} parent=1 // pred_check
      _
    $region31: #{tpu_custom_call.1} parent=1 // pred_check_branch
      %107 = sbr.rel (0) target = $region33
    $region32: #{tpu_custom_call.1} parent=1 // pred_region
      %s109 = ssub.s32 128, 128
      %110 = vsyncadd [#allocation4], %s109
      %s112 = sshll.u32 [#allocation9], 4
      %s113 = int_to_ptr.vmem [resolvable:$true] %s112
      %115 = dma.vmem_to_hbm [thread:$0]  %s113, 128, %s4, [#allocation4]
    $region33: #{tpu_custom_call.1} parent=1 // pred_fallthru
      _
    // Predicated region
    $region34: #{tpu_custom_call.1} parent=1 // pred_check
      _
    $region35: #{tpu_custom_call.1} parent=1 // pred_check_branch
      %117 = sbr.rel (0) target = $region37
    $region36: #{tpu_custom_call.1} parent=1 // pred_region
      %118 = dma.done [#allocation4], 128
    $region37: #{tpu_custom_call.1} parent=1 // pred_fallthru
      _
    %119 = vsyncpa [#allocation3], 1
    %120 = vsyncpa [#allocation7], 1
    %121 = vsyncpa [#allocation4], 1
    %122 = vsyncpa [#allocation5], 1

</llo_original>
